<compile_context>
chip_gen: v5e
topology: v5e:2x2
jax: 0.10.0
libtpu: 0.0.40
codegen_flags: <defaults>
</compile_context>

<pallas_src>
import numpy as np
import jax
import jax.numpy as jnp
from jax import lax
from jax.experimental import pallas as pl
from jax.experimental.pallas import tpu as pltpu

# Small example shapes (module params): batch, seq_len, feature_size,
# hidden_size, num_output.  direction=2 (bidirectional) is hard-coded in the
# module; the example uses num_layers=1.
B, T, F, H, O = 2, 8, 16, 32, 8
# TODO(synk): num_layers > 1 would stack this same recurrence; example keeps
# the module's simplest configuration (num_layers=1).


def rnn_kernel(xp_ref, wih_ref, b_ref, whh_ref, wfcA_ref, wfcB_ref, bfc_ref,
               out_ref):
    """Fused bidirectional ReLU-RNN + Linear + LogSoftmax, everything in vregs.

    Inputs (pre-packed in the wrapper):
      xp_ref   : (T*B, 2F)  row t*B+b = [x[b, t, :], x[b, T-1-t, :]]
      wih_ref  : (2F, 2H)   block_diag(W_ih_f^T, W_ih_b^T)
      b_ref    : (1, 2H)    [b_ih_f + b_hh_f || b_ih_b + b_hh_b]
      whh_ref  : (2H, 2H)   block_diag(W_hh_f^T, W_hh_b^T)
      wfcA_ref : (2H, O)    [W_fc[:, :H]^T ; 0]   (fwd half of the FC weight)
      wfcB_ref : (2H, O)    [0 ; W_fc[:, H:]^T]   (bwd half of the FC weight)
      bfc_ref  : (1, O)
    Output:
      out_ref  : (T*B, O)   time-major log-probabilities
    """
    xp = xp_ref[...]                               # (T*B, 2F)
    wih = wih_ref[...]                             # (2F, 2H)
    b = b_ref[...]                                 # (1, 2H)
    whh = whh_ref[...]                             # (2H, 2H)

    # Input contributions for all steps, fused fwd/bwd ordering, one matmul.
    # Row t*B+b of x_pre = [x_t W_ih_f^T + b_f  ||  x_{T-1-t} W_ih_b^T + b_b].
    x_pre = jnp.dot(xp, wih, preferred_element_type=jnp.float32) + b   # (T*B, 2H)

    # Fused recurrence, fully unrolled: one (B,2H)x(2H,2H) matmul per step.
    # h[:, :H] tracks the forward direction at time t,
    # h[:, H:] tracks the backward direction at time T-1-t.
    h = jnp.zeros((B, 2 * H), jnp.float32)
    states = []
    for t in range(T):
        pre = x_pre[t * B:(t + 1) * B, :] + jnp.dot(
            h, whh, preferred_element_type=jnp.float32)
        h = jnp.maximum(pre, 0.0)
        states.append(h)

    # Time-align the two directions without any lane slicing/concat:
    #   hf[t*B+b] = states[t]       -> fwd half is h_f[t]
    #   hb[t*B+b] = states[T-1-t]   -> bwd half is h_b[t]
    # The zero-padded FC halves (wfcA / wfcB) pick out the right columns.
    hf = jnp.concatenate(states, axis=0)           # (T*B, 2H)
    hb = jnp.concatenate(states[::-1], axis=0)     # (T*B, 2H)

    logits = (jnp.dot(hf, wfcA_ref[...], preferred_element_type=jnp.float32)
              + jnp.dot(hb, wfcB_ref[...], preferred_element_type=jnp.float32)
              + bfc_ref[...])                      # (T*B, O)

    # Log-softmax over the class dim.
    m = jnp.max(logits, axis=-1, keepdims=True)
    z = logits - m
    lse = jnp.log(jnp.sum(jnp.exp(z), axis=-1, keepdims=True))
    out_ref[...] = z - lse


def _rnn_forward_impl(x, params):
    """Wrapper: all layout plumbing / weight packing happens here in XLA."""
    wih_f, whh_f, b_f, wih_b, whh_b, b_b, wfc, bfc = params

    # x -> time-major, pair each timestep t with its mirror T-1-t.
    xs = jnp.transpose(x, (1, 0, 2))                               # (T, B, F)
    x_pair = jnp.concatenate([xs, xs[::-1]], axis=-1).reshape(T * B, 2 * F)

    # Block-diagonal, pre-transposed weights (consumed as right operands).
    wih_bd = jnp.zeros((2 * F, 2 * H), jnp.float32)
    wih_bd = wih_bd.at[:F, :H].set(wih_f.T).at[F:, H:].set(wih_b.T)
    whh_bd = jnp.zeros((2 * H, 2 * H), jnp.float32)
    whh_bd = whh_bd.at[:H, :H].set(whh_f.T).at[H:, H:].set(whh_b.T)
    b_cat = jnp.concatenate([b_f, b_b], axis=-1)                   # (1, 2H)

    # FC weight split + zero-padded so the kernel never slices lanes.
    zeros_HO = jnp.zeros((H, O), jnp.float32)
    wfc_A = jnp.concatenate([wfc[:, :H].T, zeros_HO], axis=0)      # (2H, O)
    wfc_B = jnp.concatenate([zeros_HO, wfc[:, H:].T], axis=0)      # (2H, O)

    vmem = pltpu.MemorySpace.VMEM
    out_tm = pl.pallas_call(
        rnn_kernel,
        out_shape=jax.ShapeDtypeStruct((T * B, O), jnp.float32),
        in_specs=[pl.BlockSpec(memory_space=vmem)] * 7,
        out_specs=pl.BlockSpec(memory_space=vmem),
    )(x_pair, wih_bd, b_cat, whh_bd, wfc_A, wfc_B, bfc)

    # Back to batch-first (B, T, O) outside the kernel.
    return jnp.transpose(out_tm.reshape(T, B, O), (1, 0, 2))


rnn_forward = jax.jit(_rnn_forward_impl)


def ref_forward(x, wih_f, whh_f, b_f, wih_b, whh_b, b_b, wfc, bfc):
    """Pure-JAX reference (mirrors PyTorch RNN+Linear+LogSoftmax semantics)."""
    def run_dir(wih, whh, b, xs):
        def step(h, xt):
            h_new = jnp.maximum(xt @ wih.T + h @ whh.T + b, 0.0)
            return h_new, h_new
        _, hs = lax.scan(step, jnp.zeros((B, H), jnp.float32), xs)
        return hs                                               # (T, B, H)

    xs = jnp.transpose(x, (1, 0, 2))                            # (T, B, F)
    hf = run_dir(wih_f, whh_f, b_f, xs)
    hb = run_dir(wih_b, whh_b, b_b, xs[::-1])[::-1]
    hcat = jnp.concatenate([hf, hb], axis=-1)                   # (T, B, 2H)
    logits = hcat @ wfc.T + bfc
    logp = jax.nn.log_softmax(logits, axis=-1)
    return jnp.transpose(logp, (1, 0, 2))                       # (B, T, O)


def make_params(key):
    """Deterministic N(0, 0.01) init, matching the module's __init__."""
    ks = jax.random.split(key, 11)
    s = 0.01
    wih_f = s * jax.random.normal(ks[0], (H, F), jnp.float32)
    whh_f = s * jax.random.normal(ks[1], (H, H), jnp.float32)
    b_ih_f = s * jax.random.normal(ks[2], (H,), jnp.float32)
    b_hh_f = s * jax.random.normal(ks[3], (H,), jnp.float32)
    wih_b = s * jax.random.normal(ks[4], (H, F), jnp.float32)
    whh_b = s * jax.random.normal(ks[5], (H, H), jnp.float32)
    b_ih_b = s * jax.random.normal(ks[6], (H,), jnp.float32)
    b_hh_b = s * jax.random.normal(ks[7], (H,), jnp.float32)
    wfc = s * jax.random.normal(ks[8], (O, 2 * H), jnp.float32)
    bfc = s * jax.random.normal(ks[9], (O,), jnp.float32)
    # Biases are always used as (b_ih + b_hh); fold them and keep 2-D for TPU.
    b_f = (b_ih_f + b_hh_f).reshape(1, H)
    b_b = (b_ih_b + b_hh_b).reshape(1, H)
    return (wih_f, whh_f, b_f, wih_b, whh_b, b_b, wfc, bfc.reshape(1, O))


if __name__ == "__main__":
    key = jax.random.PRNGKey(0)
    pkey, xkey = jax.random.split(key)
    params = make_params(pkey)
    x = jax.random.normal(xkey, (B, T, F), jnp.float32)

    out = rnn_forward(x, params)
    out = jax.block_until_ready(out)

    ref = ref_forward(x, *params)
    np.testing.assert_allclose(np.asarray(out), np.asarray(ref),
                               rtol=1e-4, atol=1e-4)
    print("KERNEL_OK")
</pallas_src>

<mosaic_0001>
module attributes {stable_mosaic.version = 11 : i64} {
  func.func @rnn_kernel(%arg0: memref<16x32xf32, #tpu.memory_space<vmem>>, %arg1: memref<32x64xf32, #tpu.memory_space<vmem>>, %arg2: memref<1x64xf32, #tpu.memory_space<vmem>>, %arg3: memref<64x64xf32, #tpu.memory_space<vmem>>, %arg4: memref<64x8xf32, #tpu.memory_space<vmem>>, %arg5: memref<64x8xf32, #tpu.memory_space<vmem>>, %arg6: memref<1x8xf32, #tpu.memory_space<vmem>>, %arg7: memref<16x8xf32, #tpu.memory_space<vmem>>) attributes {dimension_semantics = [], scalar_prefetch = 0 : i64, scratch_operands = 0 : i64, tpu.core_type = #tpu.core_type<tc>} {
    %c0 = arith.constant 0 : index
    %c0_0 = arith.constant 0 : index
    %0 = vector.load %arg0[%c0, %c0_0] : memref<16x32xf32, #tpu.memory_space<vmem>>, vector<16x32xf32>
    %c0_1 = arith.constant 0 : index
    %c0_2 = arith.constant 0 : index
    %1 = vector.load %arg1[%c0_1, %c0_2] : memref<32x64xf32, #tpu.memory_space<vmem>>, vector<32x64xf32>
    %c0_3 = arith.constant 0 : index
    %c0_4 = arith.constant 0 : index
    %2 = vector.load %arg2[%c0_3, %c0_4] : memref<1x64xf32, #tpu.memory_space<vmem>>, vector<1x64xf32>
    %c0_5 = arith.constant 0 : index
    %c0_6 = arith.constant 0 : index
    %3 = vector.load %arg3[%c0_5, %c0_6] : memref<64x64xf32, #tpu.memory_space<vmem>>, vector<64x64xf32>
    %cst = arith.constant dense<0.000000e+00> : vector<16x64xf32>
    %4 = tpu.matmul %0, %1, %cst {dimension_numbers = #tpu.dot_dimension_numbers<[1], [0], [0], [1], [0, 0, 1, 1], [], []>} : vector<16x32xf32>, vector<32x64xf32>, vector<16x64xf32> -> vector<16x64xf32>
    %5 = vector.broadcast %2 : vector<1x64xf32> to vector<16x64xf32>
    %6 = arith.addf %4, %5 : vector<16x64xf32>
    %cst_7 = arith.constant 0.000000e+00 : f32
    %7 = vector.broadcast %cst_7 : f32 to vector<2x64xf32>
    %8 = vector.extract_strided_slice %6 {offsets = [0, 0], sizes = [2, 64], strides = [1, 1]} : vector<16x64xf32> to vector<2x64xf32>
    %cst_8 = arith.constant dense<0.000000e+00> : vector<2x64xf32>
    %9 = tpu.matmul %7, %3, %cst_8 {dimension_numbers = #tpu.dot_dimension_numbers<[1], [0], [0], [1], [0, 0, 1, 1], [], []>} : vector<2x64xf32>, vector<64x64xf32>, vector<2x64xf32> -> vector<2x64xf32>
    %10 = arith.addf %8, %9 : vector<2x64xf32>
    %cst_9 = arith.constant 0.000000e+00 : f32
    %11 = vector.broadcast %cst_9 : f32 to vector<2x64xf32>
    %12 = arith.maximumf %10, %11 : vector<2x64xf32>
    %13 = vector.extract_strided_slice %6 {offsets = [2, 0], sizes = [2, 64], strides = [1, 1]} : vector<16x64xf32> to vector<2x64xf32>
    %cst_10 = arith.constant dense<0.000000e+00> : vector<2x64xf32>
    %14 = tpu.matmul %12, %3, %cst_10 {dimension_numbers = #tpu.dot_dimension_numbers<[1], [0], [0], [1], [0, 0, 1, 1], [], []>} : vector<2x64xf32>, vector<64x64xf32>, vector<2x64xf32> -> vector<2x64xf32>
    %15 = arith.addf %13, %14 : vector<2x64xf32>
    %cst_11 = arith.constant 0.000000e+00 : f32
    %16 = vector.broadcast %cst_11 : f32 to vector<2x64xf32>
    %17 = arith.maximumf %15, %16 : vector<2x64xf32>
    %18 = vector.extract_strided_slice %6 {offsets = [4, 0], sizes = [2, 64], strides = [1, 1]} : vector<16x64xf32> to vector<2x64xf32>
    %cst_12 = arith.constant dense<0.000000e+00> : vector<2x64xf32>
    %19 = tpu.matmul %17, %3, %cst_12 {dimension_numbers = #tpu.dot_dimension_numbers<[1], [0], [0], [1], [0, 0, 1, 1], [], []>} : vector<2x64xf32>, vector<64x64xf32>, vector<2x64xf32> -> vector<2x64xf32>
    %20 = arith.addf %18, %19 : vector<2x64xf32>
    %cst_13 = arith.constant 0.000000e+00 : f32
    %21 = vector.broadcast %cst_13 : f32 to vector<2x64xf32>
    %22 = arith.maximumf %20, %21 : vector<2x64xf32>
    %23 = vector.extract_strided_slice %6 {offsets = [6, 0], sizes = [2, 64], strides = [1, 1]} : vector<16x64xf32> to vector<2x64xf32>
    %cst_14 = arith.constant dense<0.000000e+00> : vector<2x64xf32>
    %24 = tpu.matmul %22, %3, %cst_14 {dimension_numbers = #tpu.dot_dimension_numbers<[1], [0], [0], [1], [0, 0, 1, 1], [], []>} : vector<2x64xf32>, vector<64x64xf32>, vector<2x64xf32> -> vector<2x64xf32>
    %25 = arith.addf %23, %24 : vector<2x64xf32>
    %cst_15 = arith.constant 0.000000e+00 : f32
    %26 = vector.broadcast %cst_15 : f32 to vector<2x64xf32>
    %27 = arith.maximumf %25, %26 : vector<2x64xf32>
    %28 = vector.extract_strided_slice %6 {offsets = [8, 0], sizes = [2, 64], strides = [1, 1]} : vector<16x64xf32> to vector<2x64xf32>
    %cst_16 = arith.constant dense<0.000000e+00> : vector<2x64xf32>
    %29 = tpu.matmul %27, %3, %cst_16 {dimension_numbers = #tpu.dot_dimension_numbers<[1], [0], [0], [1], [0, 0, 1, 1], [], []>} : vector<2x64xf32>, vector<64x64xf32>, vector<2x64xf32> -> vector<2x64xf32>
    %30 = arith.addf %28, %29 : vector<2x64xf32>
    %cst_17 = arith.constant 0.000000e+00 : f32
    %31 = vector.broadcast %cst_17 : f32 to vector<2x64xf32>
    %32 = arith.maximumf %30, %31 : vector<2x64xf32>
    %33 = vector.extract_strided_slice %6 {offsets = [10, 0], sizes = [2, 64], strides = [1, 1]} : vector<16x64xf32> to vector<2x64xf32>
    %cst_18 = arith.constant dense<0.000000e+00> : vector<2x64xf32>
    %34 = tpu.matmul %32, %3, %cst_18 {dimension_numbers = #tpu.dot_dimension_numbers<[1], [0], [0], [1], [0, 0, 1, 1], [], []>} : vector<2x64xf32>, vector<64x64xf32>, vector<2x64xf32> -> vector<2x64xf32>
    %35 = arith.addf %33, %34 : vector<2x64xf32>
    %cst_19 = arith.constant 0.000000e+00 : f32
    %36 = vector.broadcast %cst_19 : f32 to vector<2x64xf32>
    %37 = arith.maximumf %35, %36 : vector<2x64xf32>
    %38 = vector.extract_strided_slice %6 {offsets = [12, 0], sizes = [2, 64], strides = [1, 1]} : vector<16x64xf32> to vector<2x64xf32>
    %cst_20 = arith.constant dense<0.000000e+00> : vector<2x64xf32>
    %39 = tpu.matmul %37, %3, %cst_20 {dimension_numbers = #tpu.dot_dimension_numbers<[1], [0], [0], [1], [0, 0, 1, 1], [], []>} : vector<2x64xf32>, vector<64x64xf32>, vector<2x64xf32> -> vector<2x64xf32>
    %40 = arith.addf %38, %39 : vector<2x64xf32>
    %cst_21 = arith.constant 0.000000e+00 : f32
    %41 = vector.broadcast %cst_21 : f32 to vector<2x64xf32>
    %42 = arith.maximumf %40, %41 : vector<2x64xf32>
    %43 = vector.extract_strided_slice %6 {offsets = [14, 0], sizes = [2, 64], strides = [1, 1]} : vector<16x64xf32> to vector<2x64xf32>
    %cst_22 = arith.constant dense<0.000000e+00> : vector<2x64xf32>
    %44 = tpu.matmul %42, %3, %cst_22 {dimension_numbers = #tpu.dot_dimension_numbers<[1], [0], [0], [1], [0, 0, 1, 1], [], []>} : vector<2x64xf32>, vector<64x64xf32>, vector<2x64xf32> -> vector<2x64xf32>
    %45 = arith.addf %43, %44 : vector<2x64xf32>
    %cst_23 = arith.constant 0.000000e+00 : f32
    %46 = vector.broadcast %cst_23 : f32 to vector<2x64xf32>
    %47 = arith.maximumf %45, %46 : vector<2x64xf32>
    %48 = tpu.concatenate %12, %17, %22, %27, %32, %37, %42, %47 in 0 : vector<2x64xf32>, vector<2x64xf32>, vector<2x64xf32>, vector<2x64xf32>, vector<2x64xf32>, vector<2x64xf32>, vector<2x64xf32>, vector<2x64xf32> -> vector<16x64xf32>
    %49 = tpu.concatenate %47, %42, %37, %32, %27, %22, %17, %12 in 0 : vector<2x64xf32>, vector<2x64xf32>, vector<2x64xf32>, vector<2x64xf32>, vector<2x64xf32>, vector<2x64xf32>, vector<2x64xf32>, vector<2x64xf32> -> vector<16x64xf32>
    %c0_24 = arith.constant 0 : index
    %c0_25 = arith.constant 0 : index
    %50 = vector.load %arg4[%c0_24, %c0_25] : memref<64x8xf32, #tpu.memory_space<vmem>>, vector<64x8xf32>
    %cst_26 = arith.constant dense<0.000000e+00> : vector<16x8xf32>
    %51 = tpu.matmul %48, %50, %cst_26 {dimension_numbers = #tpu.dot_dimension_numbers<[1], [0], [0], [1], [0, 0, 1, 1], [], []>} : vector<16x64xf32>, vector<64x8xf32>, vector<16x8xf32> -> vector<16x8xf32>
    %c0_27 = arith.constant 0 : index
    %c0_28 = arith.constant 0 : index
    %52 = vector.load %arg5[%c0_27, %c0_28] : memref<64x8xf32, #tpu.memory_space<vmem>>, vector<64x8xf32>
    %cst_29 = arith.constant dense<0.000000e+00> : vector<16x8xf32>
    %53 = tpu.matmul %49, %52, %cst_29 {dimension_numbers = #tpu.dot_dimension_numbers<[1], [0], [0], [1], [0, 0, 1, 1], [], []>} : vector<16x64xf32>, vector<64x8xf32>, vector<16x8xf32> -> vector<16x8xf32>
    %54 = arith.addf %51, %53 : vector<16x8xf32>
    %c0_30 = arith.constant 0 : index
    %c0_31 = arith.constant 0 : index
    %55 = vector.load %arg6[%c0_30, %c0_31] : memref<1x8xf32, #tpu.memory_space<vmem>>, vector<1x8xf32>
    %56 = vector.broadcast %55 : vector<1x8xf32> to vector<16x8xf32>
    %57 = arith.addf %54, %56 : vector<16x8xf32>
    %cst_32 = arith.constant dense<0xFF800000> : vector<16xf32>
    %58 = vector.multi_reduction <maximumf>, %57, %cst_32 [1] : vector<16x8xf32> to vector<16xf32>
    %59 = vector.shape_cast %58 : vector<16xf32> to vector<16x1xf32>
    %60 = vector.broadcast %59 : vector<16x1xf32> to vector<16x8xf32>
    %61 = arith.subf %57, %60 : vector<16x8xf32>
    %62 = math.exp %61 : vector<16x8xf32>
    %cst_33 = arith.constant dense<0.000000e+00> : vector<16xf32>
    %63 = vector.multi_reduction <add>, %62, %cst_33 [1] : vector<16x8xf32> to vector<16xf32>
    %64 = vector.shape_cast %63 : vector<16xf32> to vector<16x1xf32>
    %65 = math.log %64 : vector<16x1xf32>
    %66 = vector.broadcast %65 : vector<16x1xf32> to vector<16x8xf32>
    %67 = arith.subf %61, %66 : vector<16x8xf32>
    %c0_34 = arith.constant 0 : index
    %c0_35 = arith.constant 0 : index
    %68 = vector.load %arg7[%c0_34, %c0_35] : memref<16x8xf32, #tpu.memory_space<vmem>>, vector<16x8xf32>
    tpu.vector_store %arg7[%c0_34, %c0_35], %67 {strides = array<i32>} : memref<16x8xf32, #tpu.memory_space<vmem>>, vector<16x8xf32>,
    return
  }
}

</mosaic_0001>

<llo_original>
// kernel: _rnn_forward_impl.1
$region0: #{_rnn_forward_impl.1}
  #allocation0 [shape = 'u32[]', space=smem, size = 0x4, offset = 0x4, fixed_abs, tag = 'smem constant byte address 0x4 - core index']
  #allocation1 [shape = 'u32[72,128]{1,0:T(1,128)}', space=vmem, size = 0x9000, scoped, tag = 'internal scratch']
  %s0 = inlined_call_operand.vmem [shape: f32[16,32], index: 0, kind: input, shape index: {}]
  %s1 = inlined_call_operand.vmem [shape: f32[32,64], index: 1, kind: input, shape index: {}]
  %s2 = inlined_call_operand.vmem [shape: f32[1,64], index: 2, kind: input, shape index: {}]
  %s3 = inlined_call_operand.vmem [shape: f32[64,64], index: 3, kind: input, shape index: {}]
  %s4 = inlined_call_operand.vmem [shape: f32[64,8], index: 4, kind: input, shape index: {}]
  %s5 = inlined_call_operand.vmem [shape: f32[64,8], index: 5, kind: input, shape index: {}]
  %s6 = inlined_call_operand.vmem [shape: f32[1,8], index: 6, kind: input, shape index: {}]
  %s7 = inlined_call_operand.vmem [shape: f32[16,8], index: 7, kind: output, shape index: {}]
  %s8 = sld [smem:[#allocation0]]
  $region38: #{_rnn_forward_impl.1} parent=0
    _
  %s10 = ssub.s32 1, %s8
  %s11 = scalar_select 0, %s10, %s8
  // Predicated region
  $region2: #{_rnn_forward_impl.1} parent=0 // pred_check
    _
  $region3: #{_rnn_forward_impl.1} parent=0 // pred_check_branch
    %13 = sbr.rel (0) target = $region5
  $region4: #{_rnn_forward_impl.1} parent=0 // pred_region
    _
  $region5: #{_rnn_forward_impl.1} parent=0 // pred_fallthru
    _
  // Predicated region
  $region6: #{_rnn_forward_impl.1} parent=0 // pred_check
    _
  $region7: #{_rnn_forward_impl.1} parent=0 // pred_check_branch
    %15 = sbr.rel (0) target = $region9
  $region8: #{_rnn_forward_impl.1} parent=0 // pred_region
    _
  $region9: #{_rnn_forward_impl.1} parent=0 // pred_fallthru
    _
  // Predicated region
  $region10: #{_rnn_forward_impl.1} parent=0 // pred_check
    _
  $region11: #{_rnn_forward_impl.1} parent=0 // pred_check_branch
    %17 = sbr.rel (0) target = $region13
  $region12: #{_rnn_forward_impl.1} parent=0 // pred_region
    _
  $region13: #{_rnn_forward_impl.1} parent=0 // pred_fallthru
    _
  // Predicated region
  $region14: #{_rnn_forward_impl.1} parent=0 // pred_check
    _
  $region15: #{_rnn_forward_impl.1} parent=0 // pred_check_branch
    %19 = sbr.rel (0) target = $region17
  $region16: #{_rnn_forward_impl.1} parent=0 // pred_region
    _
  $region17: #{_rnn_forward_impl.1} parent=0 // pred_fallthru
    _
  // Predicated region
  $region18: #{_rnn_forward_impl.1} parent=0 // pred_check
    _
  $region19: #{_rnn_forward_impl.1} parent=0 // pred_check_branch
    %21 = sbr.rel (0) target = $region21
  $region20: #{_rnn_forward_impl.1} parent=0 // pred_region
    _
  $region21: #{_rnn_forward_impl.1} parent=0 // pred_fallthru
    _
  // Predicated region
  $region22: #{_rnn_forward_impl.1} parent=0 // pred_check
    _
  $region23: #{_rnn_forward_impl.1} parent=0 // pred_check_branch
    %23 = sbr.rel (0) target = $region25
  $region24: #{_rnn_forward_impl.1} parent=0 // pred_region
    _
  $region25: #{_rnn_forward_impl.1} parent=0 // pred_fallthru
    _
  // Predicated region
  $region26: #{_rnn_forward_impl.1} parent=0 // pred_check
    _
  $region27: #{_rnn_forward_impl.1} parent=0 // pred_check_branch
    %25 = sbr.rel (0) target = $region29
  $region28: #{_rnn_forward_impl.1} parent=0 // pred_region
    _
  $region29: #{_rnn_forward_impl.1} parent=0 // pred_fallthru
    _
  %v26 = vld [vmem:[%s0] sm:$0xff]
  %v27 = vld [vmem:[%s0 + $0x8] sm:$0xff]
  %v28 = vld [vmem:[%s1] sm:$0xff]
  %v29 = vld [vmem:[%s1 + $0x8] sm:$0xff]
  %v30 = vld [vmem:[%s1 + $0x10] sm:$0xff]
  %v31 = vld [vmem:[%s1 + $0x18] sm:$0xff]
  %v32 = vld [vmem:[%s2] sm:$0x1]
  %v33 = vld [vmem:[%s3] sm:$0xff]
  %v34 = vld [vmem:[%s3 + $0x8] sm:$0xff]
  %v35 = vld [vmem:[%s3 + $0x10] sm:$0xff]
  %v36 = vld [vmem:[%s3 + $0x18] sm:$0xff]
  %v37 = vld [vmem:[%s3 + $0x20] sm:$0xff]
  %v38 = vld [vmem:[%s3 + $0x28] sm:$0xff]
  %v39 = vld [vmem:[%s3 + $0x30] sm:$0xff]
  %v40 = vld [vmem:[%s3 + $0x38] sm:$0xff]
  %v42 = vperm.slane %v32, 0
  %vm44 = vcmask 261120
  %v46 = vsel %vm44, %v26, 0
  %v49 = vsel %vm44, %v27, 0
  %51 = vmatpush.msra.mxu0 0.0
  %52 = vmatpush.msra.mxu0 0.0
  %53 = vmatpush.msra.mxu0 0.0
  %54 = vmatpush.msra.mxu0 0.0
  %55 = vmatpush.msra.mxu0 0.0
  %56 = vmatpush.msra.mxu0 0.0
  %57 = vmatpush.msra.mxu0 0.0
  %58 = vmatpush.msra.mxu0 0.0
  %59 = vmatpush.msra.mxu0 0.0
  %60 = vmatpush.msra.mxu0 0.0
  %61 = vmatpush.msra.mxu0 0.0
  %62 = vmatpush.msra.mxu0 0.0
  %63 = vmatpush.msra.mxu0 %v31
  %64 = vmatpush.msra.mxu0 %v30
  %65 = vmatpush.msra.mxu0 %v29
  %66 = vmatpush.msra.mxu0 %v28
  %67 = vmatmul.f32.gmra.mxu0 %v46
  %v68 = vpop.f32.mrf.mxu0
  %v69 = vadd.f32 %v42, %v68
  %70 = vmatmul.f32.gmra.mxu0 %v49
  %v71 = vpop.f32.mrf.mxu0
  %v72 = vadd.f32 %v42, %v71
  %73 = vdwg.mxu0
  %vm74 = vcmask 523264
  %v76 = vsel %vm74, 0.0, 0
  %78 = vmatpush.msra.mxu0 0.0
  %79 = vmatpush.msra.mxu0 0.0
  %80 = vmatpush.msra.mxu0 0.0
  %81 = vmatpush.msra.mxu0 0.0
  %82 = vmatpush.msra.mxu0 0.0
  %83 = vmatpush.msra.mxu0 0.0
  %84 = vmatpush.msra.mxu0 0.0
  %85 = vmatpush.msra.mxu0 0.0
  %86 = vmatpush.msra.mxu0 %v40
  %87 = vmatpush.msra.mxu0 %v39
  %88 = vmatpush.msra.mxu0 %v38
  %89 = vmatpush.msra.mxu0 %v37
  %90 = vmatpush.msra.mxu0 %v36
  %91 = vmatpush.msra.mxu0 %v35
  %92 = vmatpush.msra.mxu0 %v34
  %93 = vmatpush.msra.mxu0 %v33
  %94 = vmatmul.f32.gmra.mxu0 %v76
  %v95 = vpop.f32.mrf.mxu0
  %v96 = vadd.f32 0.0, %v95
  %97 = vdwg.mxu0
  %v98 = vadd.f32 %v69, %v96
  %v99 = vmax.f32 %v98, 0.0
  %v101 = vsel %vm74, %v99, 0
  %103 = vmatpush.msra.mxu0 0.0
  %104 = vmatpush.msra.mxu0 0.0
  %105 = vmatpush.msra.mxu0 0.0
  %106 = vmatpush.msra.mxu0 0.0
  %107 = vmatpush.msra.mxu0 0.0
  %108 = vmatpush.msra.mxu0 0.0
  %109 = vmatpush.msra.mxu0 0.0
  %110 = vmatpush.msra.mxu0 0.0
  %111 = vmatpush.msra.mxu0 %v40
  %112 = vmatpush.msra.mxu0 %v39
  %113 = vmatpush.msra.mxu0 %v38
  %114 = vmatpush.msra.mxu0 %v37
  %115 = vmatpush.msra.mxu0 %v36
  %116 = vmatpush.msra.mxu0 %v35
  %117 = vmatpush.msra.mxu0 %v34
  %118 = vmatpush.msra.mxu0 %v33
  %119 = vmatmul.f32.gmra.mxu0 %v101
  %v120 = vpop.f32.mrf.mxu0
  %v121 = vadd.f32 0.0, %v120
  %122 = vdwg.mxu0
  %v124 = vrot.slane %v121, 6
  %v126 = vadd.f32 %v69, %v124
  %v127 = vmax.f32 %v126, 0.0
  %v129 = vrot.slane %v127, 2
  %v130 = vsel %vm74, %v129, 0
  %132 = vmatpush.msra.mxu0 0.0
  %133 = vmatpush.msra.mxu0 0.0
  %134 = vmatpush.msra.mxu0 0.0
  %135 = vmatpush.msra.mxu0 0.0
  %136 = vmatpush.msra.mxu0 0.0
  %137 = vmatpush.msra.mxu0 0.0
  %138 = vmatpush.msra.mxu0 0.0
  %139 = vmatpush.msra.mxu0 0.0
  %140 = vmatpush.msra.mxu0 %v40
  %141 = vmatpush.msra.mxu0 %v39
  %142 = vmatpush.msra.mxu0 %v38
  %143 = vmatpush.msra.mxu0 %v37
  %144 = vmatpush.msra.mxu0 %v36
  %145 = vmatpush.msra.mxu0 %v35
  %146 = vmatpush.msra.mxu0 %v34
  %147 = vmatpush.msra.mxu0 %v33
  %148 = vmatmul.f32.gmra.mxu0 %v130
  %v149 = vpop.f32.mrf.mxu0
  %v150 = vadd.f32 0.0, %v149
  %151 = vdwg.mxu0
  %v153 = vrot.slane %v150, 4
  %v155 = vadd.f32 %v69, %v153
  %v156 = vmax.f32 %v155, 0.0
  %v158 = vrot.slane %v156, 4
  %v159 = vsel %vm74, %v158, 0
  %161 = vmatpush.msra.mxu0 0.0
  %162 = vmatpush.msra.mxu0 0.0
  %163 = vmatpush.msra.mxu0 0.0
  %164 = vmatpush.msra.mxu0 0.0
  %165 = vmatpush.msra.mxu0 0.0
  %166 = vmatpush.msra.mxu0 0.0
  %167 = vmatpush.msra.mxu0 0.0
  %168 = vmatpush.msra.mxu0 0.0
  %169 = vmatpush.msra.mxu0 %v40
  %170 = vmatpush.msra.mxu0 %v39
  %171 = vmatpush.msra.mxu0 %v38
  %172 = vmatpush.msra.mxu0 %v37
  %173 = vmatpush.msra.mxu0 %v36
  %174 = vmatpush.msra.mxu0 %v35
  %175 = vmatpush.msra.mxu0 %v34
  %176 = vmatpush.msra.mxu0 %v33
  %177 = vmatmul.f32.gmra.mxu0 %v159
  %v178 = vpop.f32.mrf.mxu0
  %v179 = vadd.f32 0.0, %v178
  %180 = vdwg.mxu0
  %v182 = vrot.slane %v179, 2
  %v184 = vadd.f32 %v69, %v182
  %v185 = vmax.f32 %v184, 0.0
  %v187 = vrot.slane %v185, 6
  %v188 = vsel %vm74, %v187, 0
  %190 = vmatpush.msra.mxu0 0.0
  %191 = vmatpush.msra.mxu0 0.0
  %192 = vmatpush.msra.mxu0 0.0
  %193 = vmatpush.msra.mxu0 0.0
  %194 = vmatpush.msra.mxu0 0.0
  %195 = vmatpush.msra.mxu0 0.0
  %196 = vmatpush.msra.mxu0 0.0
  %197 = vmatpush.msra.mxu0 0.0
  %198 = vmatpush.msra.mxu0 %v40
  %199 = vmatpush.msra.mxu0 %v39
  %200 = vmatpush.msra.mxu0 %v38
  %201 = vmatpush.msra.mxu0 %v37
  %202 = vmatpush.msra.mxu0 %v36
  %203 = vmatpush.msra.mxu0 %v35
  %204 = vmatpush.msra.mxu0 %v34
  %205 = vmatpush.msra.mxu0 %v33
  %206 = vmatmul.f32.gmra.mxu0 %v188
  %v207 = vpop.f32.mrf.mxu0
  %v208 = vadd.f32 0.0, %v207
  %209 = vdwg.mxu0
  %v210 = vadd.f32 %v72, %v208
  %v211 = vmax.f32 %v210, 0.0
  %v213 = vsel %vm74, %v211, 0
  %215 = vmatpush.msra.mxu0 0.0
  %216 = vmatpush.msra.mxu0 0.0
  %217 = vmatpush.msra.mxu0 0.0
  %218 = vmatpush.msra.mxu0 0.0
  %219 = vmatpush.msra.mxu0 0.0
  %220 = vmatpush.msra.mxu0 0.0
  %221 = vmatpush.msra.mxu0 0.0
  %222 = vmatpush.msra.mxu0 0.0
  %223 = vmatpush.msra.mxu0 %v40
  %224 = vmatpush.msra.mxu0 %v39
  %225 = vmatpush.msra.mxu0 %v38
  %226 = vmatpush.msra.mxu0 %v37
  %227 = vmatpush.msra.mxu0 %v36
  %228 = vmatpush.msra.mxu0 %v35
  %229 = vmatpush.msra.mxu0 %v34
  %230 = vmatpush.msra.mxu0 %v33
  %231 = vmatmul.f32.gmra.mxu0 %v213
  %v232 = vpop.f32.mrf.mxu0
  %v233 = vadd.f32 0.0, %v232
  %234 = vdwg.mxu0
  %v236 = vrot.slane %v233, 6
  %v238 = vadd.f32 %v72, %v236
  %v239 = vmax.f32 %v238, 0.0
  %v241 = vrot.slane %v239, 2
  %v242 = vsel %vm74, %v241, 0
  %244 = vmatpush.msra.mxu0 0.0
  %245 = vmatpush.msra.mxu0 0.0
  %246 = vmatpush.msra.mxu0 0.0
  %247 = vmatpush.msra.mxu0 0.0
  %248 = vmatpush.msra.mxu0 0.0
  %249 = vmatpush.msra.mxu0 0.0
  %250 = vmatpush.msra.mxu0 0.0
  %251 = vmatpush.msra.mxu0 0.0
  %252 = vmatpush.msra.mxu0 %v40
  %253 = vmatpush.msra.mxu0 %v39
  %254 = vmatpush.msra.mxu0 %v38
  %255 = vmatpush.msra.mxu0 %v37
  %256 = vmatpush.msra.mxu0 %v36
  %257 = vmatpush.msra.mxu0 %v35
  %258 = vmatpush.msra.mxu0 %v34
  %259 = vmatpush.msra.mxu0 %v33
  %260 = vmatmul.f32.gmra.mxu0 %v242
  %v261 = vpop.f32.mrf.mxu0
  %v262 = vadd.f32 0.0, %v261
  %263 = vdwg.mxu0
  %v265 = vrot.slane %v262, 4
  %v267 = vadd.f32 %v72, %v265
  %v268 = vmax.f32 %v267, 0.0
  %v270 = vrot.slane %v268, 4
  %v271 = vsel %vm74, %v270, 0
  %273 = vmatpush.msra.mxu0 0.0
  %274 = vmatpush.msra.mxu0 0.0
  %275 = vmatpush.msra.mxu0 0.0
  %276 = vmatpush.msra.mxu0 0.0
  %277 = vmatpush.msra.mxu0 0.0
  %278 = vmatpush.msra.mxu0 0.0
  %279 = vmatpush.msra.mxu0 0.0
  %280 = vmatpush.msra.mxu0 0.0
  %281 = vmatpush.msra.mxu0 %v40
  %282 = vmatpush.msra.mxu0 %v39
  %283 = vmatpush.msra.mxu0 %v38
  %284 = vmatpush.msra.mxu0 %v37
  %285 = vmatpush.msra.mxu0 %v36
  %286 = vmatpush.msra.mxu0 %v35
  %287 = vmatpush.msra.mxu0 %v34
  %288 = vmatpush.msra.mxu0 %v33
  %289 = vmatmul.f32.gmra.mxu0 %v271
  %v290 = vpop.f32.mrf.mxu0
  %v291 = vadd.f32 0.0, %v290
  %292 = vdwg.mxu0
  %v294 = vrot.slane %v291, 2
  %v296 = vadd.f32 %v72, %v294
  %v297 = vmax.f32 %v296, 0.0
  %vm298 = vcmask 1041408
  %v299 = vsel %vm298, %v99, %v127
  %vm300 = vcmask 1043456
  %v301 = vsel %vm300, %v299, %v156
  %vm302 = vcmask 1045504
  %v303 = vsel %vm302, %v301, %v185
  %v304 = vsel %vm298, %v211, %v239
  %v305 = vsel %vm300, %v304, %v268
  %v306 = vsel %vm302, %v305, %v297
  %v308 = vrot.slane %v297, 6
  %v310 = vrot.slane %v268, 2
  %v312 = vrot.slane %v239, 6
  %v314 = vrot.slane %v211, 2
  %v317 = vrot.slane %v156, 2
  %v319 = vrot.slane %v127, 6
  %v321 = vrot.slane %v99, 2
  %v323 = vsel %vm298, %v308, %v310
  %v324 = vsel %vm300, %v323, %v312
  %v325 = vsel %vm302, %v324, %v314
  %v326 = vsel %vm298, %v187, %v317
  %v327 = vsel %vm300, %v326, %v319
  %v328 = vsel %vm302, %v327, %v321
  %v329 = vld [vmem:[%s4] sm:$0xff]
  %v330 = vld [vmem:[%s4 + $0x8] sm:$0xff]
  %v331 = vld [vmem:[%s4 + $0x10] sm:$0xff]
  %v332 = vld [vmem:[%s4 + $0x18] sm:$0xff]
  %v333 = vld [vmem:[%s4 + $0x20] sm:$0xff]
  %v334 = vld [vmem:[%s4 + $0x28] sm:$0xff]
  %v335 = vld [vmem:[%s4 + $0x30] sm:$0xff]
  %v336 = vld [vmem:[%s4 + $0x38] sm:$0xff]
  %v337 = vld [vmem:[%s5] sm:$0xff]
  %v338 = vld [vmem:[%s5 + $0x8] sm:$0xff]
  %v339 = vld [vmem:[%s5 + $0x10] sm:$0xff]
  %v340 = vld [vmem:[%s5 + $0x18] sm:$0xff]
  %v341 = vld [vmem:[%s5 + $0x20] sm:$0xff]
  %v342 = vld [vmem:[%s5 + $0x28] sm:$0xff]
  %v343 = vld [vmem:[%s5 + $0x30] sm:$0xff]
  %v344 = vld [vmem:[%s5 + $0x38] sm:$0xff]
  %v346 = vsel %vm74, %v325, 0
  %v349 = vsel %vm74, %v328, 0
  %351 = vmatpush.msra.mxu0 0.0
  %352 = vmatpush.msra.mxu0 0.0
  %353 = vmatpush.msra.mxu0 0.0
  %354 = vmatpush.msra.mxu0 0.0
  %355 = vmatpush.msra.mxu0 0.0
  %356 = vmatpush.msra.mxu0 0.0
  %357 = vmatpush.msra.mxu0 0.0
  %358 = vmatpush.msra.mxu0 0.0
  %359 = vmatpush.msra.mxu0 %v344
  %360 = vmatpush.msra.mxu0 %v343
  %361 = vmatpush.msra.mxu0 %v342
  %362 = vmatpush.msra.mxu0 %v341
  %363 = vmatpush.msra.mxu0 %v340
  %364 = vmatpush.msra.mxu0 %v339
  %365 = vmatpush.msra.mxu0 %v338
  %366 = vmatpush.msra.mxu0 %v337
  %367 = vmatmul.f32.gmra.mxu0 %v346
  %v368 = vpop.f32.mrf.mxu0
  %v369 = vadd.f32 0.0, %v368
  %370 = vmatmul.f32.gmra.mxu0 %v349
  %v371 = vpop.f32.mrf.mxu0
  %v372 = vadd.f32 0.0, %v371
  %373 = vdwg.mxu0
  %v375 = vsel %vm74, %v303, 0
  %v378 = vsel %vm74, %v306, 0
  %380 = vmatpush.msra.mxu0 0.0
  %381 = vmatpush.msra.mxu0 0.0
  %382 = vmatpush.msra.mxu0 0.0
  %383 = vmatpush.msra.mxu0 0.0
  %384 = vmatpush.msra.mxu0 0.0
  %385 = vmatpush.msra.mxu0 0.0
  %386 = vmatpush.msra.mxu0 0.0
  %387 = vmatpush.msra.mxu0 0.0
  %388 = vmatpush.msra.mxu0 %v336
  %389 = vmatpush.msra.mxu0 %v335
  %390 = vmatpush.msra.mxu0 %v334
  %391 = vmatpush.msra.mxu0 %v333
  %392 = vmatpush.msra.mxu0 %v332
  %393 = vmatpush.msra.mxu0 %v331
  %394 = vmatpush.msra.mxu0 %v330
  %395 = vmatpush.msra.mxu0 %v329
  %396 = vmatmul.f32.gmra.mxu0 %v375
  %v397 = vpop.f32.mrf.mxu0
  %v398 = vadd.f32 %v369, %v397
  %399 = vmatmul.f32.gmra.mxu0 %v378
  %v400 = vpop.f32.mrf.mxu0
  %v401 = vadd.f32 %v372, %v400
  %402 = vdwg.mxu0
  %v403 = vld [vmem:[%s6] sm:$0x1]
  %v405 = vperm.slane %v403, 0
  %v407 = vadd.f32 %v398, %v405
  %v408 = vadd.f32 %v401, %v405
  %vm409 = vcmask 64512
  %v410 = vsel %vm409, %v407, -inf
  %411 = vmax.xlane.f32.xlu0 %v410
  %v412 = vpop.xlane.xlu0 %411
  %v413 = vsel %vm409, %v408, -inf
  %414 = vmax.xlane.f32.xlu0 %v413
  %v415 = vpop.xlane.xlu0 %414
  %v416 = vsub.f32 %v407, %v412
  %v417 = vsub.f32 %v408, %v415
  %v418 = vmul.f32 %v416, 1.442695
  %v419 = vpow.pop %v418
  %v420 = vmul.f32 %v417, 1.442695
  %v421 = vpow.pop %v420
  %v422 = vsel %vm409, %v419, 0.0
  %423 = vadd.xlane.f32.xlu0 %v422
  %v424 = vpop.xlane.xlu0 %423
  %v425 = vsel %vm409, %v421, 0.0
  %426 = vadd.xlane.f32.xlu0 %v425
  %v427 = vpop.xlane.xlu0 %426
  %v428 = vlog2.pop %v424
  %v429 = vmul.f32 %v428, 0.6931472
  %v430 = vlog2.pop %v427
  %v431 = vmul.f32 %v430, 0.6931472
  %v432 = vsub.f32 %v416, %v429
  %v433 = vsub.f32 %v417, %v431
  %434 = vst.msk [vmem:[%s7] sm:$0xff] %vm409, %v432
  %435 = vst.msk [vmem:[%s7 + $0x8] sm:$0xff] %vm409, %v433
  // Predicated region
  $region30: #{_rnn_forward_impl.1} parent=0 // pred_check
    _
  $region31: #{_rnn_forward_impl.1} parent=0 // pred_check_branch
    %437 = sbr.rel (0) target = $region33
  $region32: #{_rnn_forward_impl.1} parent=0 // pred_region
    _
  $region33: #{_rnn_forward_impl.1} parent=0 // pred_fallthru
    _
  // Predicated region
  $region34: #{_rnn_forward_impl.1} parent=0 // pred_check
    _
  $region35: #{_rnn_forward_impl.1} parent=0 // pred_check_branch
    %439 = sbr.rel (0) target = $region37
  $region36: #{_rnn_forward_impl.1} parent=0 // pred_region
    _
  $region37: #{_rnn_forward_impl.1} parent=0 // pred_fallthru
    _

</llo_original>
